<compile_context>
chip_gen: v7x
topology: tpu7x:2x2x1
jax: 0.10.0
libtpu: 0.0.40
codegen_flags: <defaults>
</compile_context>

<pallas_src>
import functools

import jax
import jax.numpy as jnp
from jax.experimental import pallas as pl
from jax.experimental.pallas import tpu as pltpu

# ConvSTFT(512, 256, 512, 'hamming', 'real', fix=True) parameters
WIN_LEN = 512                 # analysis window length == conv1d kernel size
WIN_INC = 256                 # hop size == conv1d stride
FFT_LEN = 512
N_BINS = FFT_LEN // 2 + 1     # 257 rfft bins
K_COLS = 512                  # 257 real cols + 255 imag cols (k=0 / Nyquist imag are exactly 0)

MAX_TILE_FRAMES = 512         # max frames (MXU M dimension) per grid step


def _stft_kernel_matrices():
    """ConvSTFT weights: windowed rfft basis, split for the split-K framing trick.

    Returns (K_top, K_bot), each (256, 512) bf16.  Columns [0, 257) = real basis,
    [257, 512) = imag basis for k = 1..255 (imag for k = 0 and k = 256 are exactly 0
    for integer t, so dropping them is exact).
    """
    t = jnp.arange(WIN_LEN, dtype=jnp.float32)
    k = jnp.arange(N_BINS, dtype=jnp.float32)
    ang = 2.0 * jnp.pi * t[:, None] * k[None, :] / FFT_LEN
    # periodic 'hamming' window (scipy get_window('hamming', N, fftbins=True))
    win = 0.54 - 0.46 * jnp.cos(2.0 * jnp.pi * t / WIN_LEN)
    real = jnp.cos(ang) * win[:, None]                       # (512, 257)
    imag = (-jnp.sin(ang))[:, 1:N_BINS - 1] * win[:, None]   # (512, 255)
    kmat = jnp.concatenate([real, imag], axis=1)             # (512, 512)
    return (kmat[:WIN_INC].astype(jnp.bfloat16),
            kmat[WIN_INC:].astype(jnp.bfloat16))


def _dpt_loss_kernel(top_ref, bot_ref, kt_ref, kb_ref, out_ref, *, w_wav, w_spec):
    # top: (tile, 256) f32 rows of the padded difference waveform; bot: same rows shifted
    # by one (bf16).  Frame f of this tile is concat(top[f], bot[f]).
    top = top_ref[...]

    # ---- waveform MSE partial: top rows cover every difference sample exactly once
    # (left-pad row and zero-padded tail frames contribute 0).  Kept in f32. ----------
    sum_sq = jnp.sum(top * top)

    # ---- ConvSTFT of the difference via split-K matmul on the MXU (bf16 in, f32 acc).
    spec = (jnp.dot(top.astype(jnp.bfloat16), kt_ref[...],
                    preferred_element_type=jnp.float32)
            + jnp.dot(bot_ref[...], kb_ref[...],
                      preferred_element_type=jnp.float32))    # (tile, 512) f32
    sum_abs = jnp.sum(jnp.abs(spec))

    partial = w_wav * sum_sq + w_spec * sum_abs               # scalar f32
    out_ref[...] = jnp.full((1, 1, 128), partial, dtype=jnp.float32)


def dpt_loss(pred, cdata, *, max_tile_frames=MAX_TILE_FRAMES):
    B, T = pred.shape
    assert T % WIN_INC == 0

    pad = WIN_LEN - WIN_INC                     # 256
    rows = T // WIN_INC + 2                     # rows of the padded difference
    num_frames = rows - 1                       # == T/256 + 1 (conv1d stride 256, pad 256)

    diff = pred.astype(jnp.float32) - cdata.astype(jnp.float32)
    x2d = jnp.pad(diff, ((0, 0), (pad, pad))).reshape(B, rows, WIN_INC)     # (B, rows, 256)

    top = x2d[:, :num_frames, :].reshape(B * num_frames, WIN_INC)           # f32 (MSE + matmul)
    bot = x2d[:, 1:, :].reshape(B * num_frames, WIN_INC).astype(jnp.bfloat16)  # matmul only

    total = B * num_frames
    tile = min(max_tile_frames, ((total + 7) // 8) * 8)       # sublane-aligned, adaptive
    padded = ((total + tile - 1) // tile) * tile
    top = jnp.pad(top, ((0, padded - total), (0, 0)))         # zero frames contribute 0
    bot = jnp.pad(bot, ((0, padded - total), (0, 0)))
    num_tiles = padded // tile

    k_top, k_bot = _stft_kernel_matrices()                    # (256, 512) bf16 each

    n_wav = float(B * T)                                      # MSELoss element count
    n_spec = float(B * N_BINS * num_frames)                   # per-half L1Loss element count
    kernel = functools.partial(_dpt_loss_kernel,
                               w_wav=0.5 / n_wav, w_spec=1.0 / n_spec)

    partials = pl.pallas_call(
        kernel,
        out_shape=jax.ShapeDtypeStruct((num_tiles, 1, 128), jnp.float32),
        grid_spec=pltpu.PrefetchScalarGridSpec(
            num_scalar_prefetch=0,
            grid=(num_tiles,),
            in_specs=[
                pl.BlockSpec((tile, WIN_INC), lambda i: (i, 0)),
                pl.BlockSpec((tile, WIN_INC), lambda i: (i, 0)),
                pl.BlockSpec((WIN_INC, K_COLS), lambda i: (0, 0)),
                pl.BlockSpec((WIN_INC, K_COLS), lambda i: (0, 0)),
            ],
            out_specs=pl.BlockSpec((1, 1, 128), lambda i: (i, 0, 0)),
        ),
        compiler_params=pltpu.CompilerParams(dimension_semantics=("parallel",)),
    )(top, bot, k_top, k_bot)

    # tiny final reduction over independent per-tile partials
    return jnp.sum(partials[:, 0, 0])


def dpt_loss_ref(pred, cdata):
    """Pure-JAX f32 reference of the same forward (for a sanity check)."""
    B, T = pred.shape
    num_frames = T // WIN_INC + 1
    pred = pred.astype(jnp.float32)
    cdata = cdata.astype(jnp.float32)
    loss_wav = jnp.mean((pred - cdata) ** 2)

    t = jnp.arange(WIN_LEN, dtype=jnp.float32)
    k = jnp.arange(N_BINS, dtype=jnp.float32)
    ang = 2.0 * jnp.pi * t[:, None] * k[None, :] / FFT_LEN
    win = 0.54 - 0.46 * jnp.cos(2.0 * jnp.pi * t / WIN_LEN)
    kr = jnp.cos(ang) * win[:, None]            # (512, 257)
    ki = -jnp.sin(ang) * win[:, None]           # (512, 257)  (full, incl. zero columns)

    def frames(x):
        xp = jnp.pad(x, ((0, 0), (WIN_LEN - WIN_INC, WIN_LEN - WIN_INC)))
        idx = jnp.arange(num_frames)[:, None] * WIN_INC + jnp.arange(WIN_LEN)[None, :]
        return xp[:, idx]                        # (B, F, 512)

    pf, cf = frames(pred), frames(cdata)
    e_r, e_i = jnp.einsum("bfw,wk->bfk", pf, kr), jnp.einsum("bfw,wk->bfk", pf, ki)
    c_r, c_i = jnp.einsum("bfw,wk->bfk", cf, kr), jnp.einsum("bfw,wk->bfk", cf, ki)
    loss_spec = jnp.mean(jnp.abs(e_r - c_r)) + jnp.mean(jnp.abs(e_i - c_i))
    return 0.5 * loss_wav + loss_spec


if __name__ == "__main__":
    key = jax.random.PRNGKey(0)
    k1, k2 = jax.random.split(key)
    B, T = 2, 2048                       # -> 9 STFT frames per signal
    pred = jax.random.normal(k1, (B, T), dtype=jnp.float32)
    cdata = jax.random.normal(k2, (B, T), dtype=jnp.float32)

    loss = jax.block_until_ready(dpt_loss(pred, cdata))
    ref = jax.block_until_ready(dpt_loss_ref(pred, cdata))

    assert bool(jnp.isfinite(loss))
    assert abs(float(loss) - float(ref)) <= 0.05 * abs(float(ref)) + 1e-3, (loss, ref)
    print("KERNEL_OK")
</pallas_src>

<mosaic_0001>
module attributes {stable_mosaic.version = 11 : i64} {
  func.func @_dpt_loss_kernel(%arg0: i32, %arg1: memref<24x256xf32, #tpu.memory_space<vmem>>, %arg2: memref<24x256xbf16, #tpu.memory_space<vmem>>, %arg3: memref<256x512xbf16, #tpu.memory_space<vmem>>, %arg4: memref<256x512xbf16, #tpu.memory_space<vmem>>, %arg5: memref<1x1x128xf32, #tpu.memory_space<vmem>>) attributes {dimension_semantics = [#tpu.dimension_semantics<parallel>], iteration_bounds = array<i64: 1>, scalar_prefetch = 0 : i64, scratch_operands = 0 : i64, tpu.core_type = #tpu.core_type<tc>, window_params = [{transform_indices = @transform_0, window_bounds = array<i64: 24, 256>}, {transform_indices = @transform_1, window_bounds = array<i64: 24, 256>}, {pipeline_mode = #tpu.pipeline_mode<synchronous>, transform_indices = @transform_2, window_bounds = array<i64: 256, 512>}, {pipeline_mode = #tpu.pipeline_mode<synchronous>, transform_indices = @transform_3, window_bounds = array<i64: 256, 512>}, {transform_indices = @transform_4, window_bounds = array<i64: 1, 1, 128>}]} {
    %c0 = arith.constant 0 : index
    %c0_0 = arith.constant 0 : index
    %0 = vector.load %arg1[%c0, %c0_0] : memref<24x256xf32, #tpu.memory_space<vmem>>, vector<24x256xf32>
    %1 = arith.mulf %0, %0 : vector<24x256xf32>
    %2 = vector.shape_cast %1 : vector<24x256xf32> to vector<1x24x256xf32>
    %cst = arith.constant dense<0.000000e+00> : vector<1xf32>
    %3 = vector.multi_reduction <add>, %2, %cst [1, 2] : vector<1x24x256xf32> to vector<1xf32>
    %4 = vector.shape_cast %3 : vector<1xf32> to vector<1x1x1xf32>
    %5 = vector.extract %4[0, 0, 0] : f32 from vector<1x1x1xf32>
    %6 = arith.truncf %0 : vector<24x256xf32> to vector<24x256xbf16>
    %c0_1 = arith.constant 0 : index
    %c0_2 = arith.constant 0 : index
    %7 = vector.load %arg3[%c0_1, %c0_2] : memref<256x512xbf16, #tpu.memory_space<vmem>>, vector<256x512xbf16>
    %cst_3 = arith.constant dense<0.000000e+00> : vector<24x512xf32>
    %8 = tpu.matmul %6, %7, %cst_3 {dimension_numbers = #tpu.dot_dimension_numbers<[1], [0], [0], [1], [0, 0, 1, 1], [], []>} : vector<24x256xbf16>, vector<256x512xbf16>, vector<24x512xf32> -> vector<24x512xf32>
    %c0_4 = arith.constant 0 : index
    %c0_5 = arith.constant 0 : index
    %9 = vector.load %arg2[%c0_4, %c0_5] : memref<24x256xbf16, #tpu.memory_space<vmem>>, vector<24x256xbf16>
    %c0_6 = arith.constant 0 : index
    %c0_7 = arith.constant 0 : index
    %10 = vector.load %arg4[%c0_6, %c0_7] : memref<256x512xbf16, #tpu.memory_space<vmem>>, vector<256x512xbf16>
    %cst_8 = arith.constant dense<0.000000e+00> : vector<24x512xf32>
    %11 = tpu.matmul %9, %10, %cst_8 {dimension_numbers = #tpu.dot_dimension_numbers<[1], [0], [0], [1], [0, 0, 1, 1], [], []>} : vector<24x256xbf16>, vector<256x512xbf16>, vector<24x512xf32> -> vector<24x512xf32>
    %12 = arith.addf %8, %11 : vector<24x512xf32>
    %13 = math.absf %12 : vector<24x512xf32>
    %14 = vector.shape_cast %13 : vector<24x512xf32> to vector<1x24x512xf32>
    %cst_9 = arith.constant dense<0.000000e+00> : vector<1xf32>
    %15 = vector.multi_reduction <add>, %14, %cst_9 [1, 2] : vector<1x24x512xf32> to vector<1xf32>
    %16 = vector.shape_cast %15 : vector<1xf32> to vector<1x1x1xf32>
    %17 = vector.extract %16[0, 0, 0] : f32 from vector<1x1x1xf32>
    %cst_10 = arith.constant 1.22070313E-4 : f32
    %18 = arith.mulf %cst_10, %5 : f32
    %cst_11 = arith.constant 2.16169472E-4 : f32
    %19 = arith.mulf %cst_11, %17 : f32
    %20 = arith.addf %18, %19 : f32
    %21 = vector.broadcast %20 : f32 to vector<1x1x128xf32>
    %c0_12 = arith.constant 0 : index
    %c0_13 = arith.constant 0 : index
    %c0_14 = arith.constant 0 : index
    %22 = vector.load %arg5[%c0_12, %c0_13, %c0_14] : memref<1x1x128xf32, #tpu.memory_space<vmem>>, vector<1x1x128xf32>
    tpu.vector_store %arg5[%c0_12, %c0_13, %c0_14], %21 {strides = array<i32>} : memref<1x1x128xf32, #tpu.memory_space<vmem>>, vector<1x1x128xf32>,
    return
  }
  func.func @transform_0(%arg0: i32) -> (i32, i32) {
    %c0_i32 = arith.constant 0 : i32
    %c0_i32_0 = arith.constant 0 : i32
    return %arg0, %c0_i32 : i32, i32
  }
  func.func @transform_1(%arg0: i32) -> (i32, i32) {
    %c0_i32 = arith.constant 0 : i32
    %c0_i32_0 = arith.constant 0 : i32
    return %arg0, %c0_i32 : i32, i32
  }
  func.func @transform_2(%arg0: i32) -> (i32, i32) {
    %c0_i32 = arith.constant 0 : i32
    %c0_i32_0 = arith.constant 0 : i32
    %c0_i32_1 = arith.constant 0 : i32
    return %c0_i32, %c0_i32_0 : i32, i32
  }
  func.func @transform_3(%arg0: i32) -> (i32, i32) {
    %c0_i32 = arith.constant 0 : i32
    %c0_i32_0 = arith.constant 0 : i32
    %c0_i32_1 = arith.constant 0 : i32
    return %c0_i32, %c0_i32_0 : i32, i32
  }
  func.func @transform_4(%arg0: i32) -> (i32, i32, i32) {
    %c0_i32 = arith.constant 0 : i32
    %c0_i32_0 = arith.constant 0 : i32
    %c0_i32_1 = arith.constant 0 : i32
    return %arg0, %c0_i32, %c0_i32_0 : i32, i32, i32
  }
}

</mosaic_0001>

<llo_original>
// kernel: tpu_custom_call.1
$region0: #{tpu_custom_call.1}
  #allocation0 [shape = 'u32[]', space=smem, size = 0x4, offset = 0x4, fixed_abs, tag = 'smem constant byte address 0x4 - core index']
  #allocation1 [shape = 'u32[144,128]{1,0:T(1,128)}', space=vmem, size = 0x12000, scoped, tag = 'internal scratch']
  %s0 = inlined_call_operand.hbm [shape: f32[24,256], index: 0, kind: input, shape index: {}]
  %s1 = inlined_call_operand.hbm [shape: bf16[24,256], index: 1, kind: input, shape index: {}]
  %s2 = inlined_call_operand.hbm [shape: bf16[256,512], index: 2, kind: input, shape index: {}]
  %s3 = inlined_call_operand.hbm [shape: bf16[256,512], index: 3, kind: input, shape index: {}]
  %s4 = inlined_call_operand.hbm [shape: f32[1,1,128], index: 4, kind: output, shape index: {}]
  %s5 = sld [smem:[#allocation0]]
  $region42: #{tpu_custom_call.1} parent=0
    _
  %s7 = ssub.s32 1, %s5
  %s8 = scalar_select 0, %s7, %s5
  $region1: #{tpu_custom_call.1} parent=0
    #allocation2 [shape = 'u8[24576]{0}', space=vmem, size = 0x6000, scoped, tag = 'input window, operand 0, single buffered']
    #allocation3 [shape = 's32[1]{0}', space=sflag, size = 0x4, scoped, tag = 'scoped memory for tpu_custom_call.1']
    #allocation4 [shape = 's32[1]{0}', space=sflag, size = 0x4, scoped, tag = 'scoped memory for tpu_custom_call.1']
    #allocation5 [shape = 'u8[12288]{0}', space=vmem, size = 0x3000, scoped, tag = 'input window, operand 1, single buffered']
    #allocation6 [shape = 's32[1]{0}', space=sflag, size = 0x4, scoped, tag = 'scoped memory for tpu_custom_call.1']
    #allocation7 [shape = 'u8[262144]{0}', space=vmem, size = 0x40000, scoped, tag = 'input window, operand 2, single buffered']
    #allocation8 [shape = 'u8[262144]{0}', space=vmem, size = 0x40000, scoped, tag = 'input window, operand 3, single buffered']
    #allocation9 [shape = 's32[1]{0}', space=sflag, size = 0x4, scoped, tag = 'scoped memory for tpu_custom_call.1']
    #allocation10 [shape = 'u8[512]{0}', space=vmem, size = 0x400, scoped, tag = 'output window, operand 0, single buffered']
    %9 = vsyncpa [#allocation3], 0
    %10 = vsyncpa [#allocation6], 0
    %11 = vsyncpa [#allocation9], 0
    %12 = vsyncpa [#allocation4], 0
    // Predicated region
    $region2: #{tpu_custom_call.1} parent=1 // pred_check
      _
    $region3: #{tpu_custom_call.1} parent=1 // pred_check_branch
      %14 = sbr.rel (0) target = $region5
    $region4: #{tpu_custom_call.1} parent=1 // pred_region
      %s16 = ssub.s32 768, 768
      %17 = vsyncadd [#allocation3], %s16
      %s18 = sshll.u32 [#allocation2], 4
      %s19 = int_to_ptr.vmem [resolvable:$true] %s18
      %24 = dma.hbm_to_vmem [thread:$0]  %s0, 768, %s19, [#allocation3], 256, 256, 16
    $region5: #{tpu_custom_call.1} parent=1 // pred_fallthru
      _
    // Predicated region
    $region6: #{tpu_custom_call.1} parent=1 // pred_check
      _
    $region7: #{tpu_custom_call.1} parent=1 // pred_check_branch
      %26 = sbr.rel (0) target = $region9
    $region8: #{tpu_custom_call.1} parent=1 // pred_region
      %s28 = ssub.s32 384, 384
      %29 = vsyncadd [#allocation6], %s28
      %s30 = sshll.u32 [#allocation5], 4
      %s31 = int_to_ptr.vmem [resolvable:$true] %s30
      %36 = dma.hbm_to_vmem [thread:$0]  %s1, 384, %s31, [#allocation6], 128, 128, 8
    $region9: #{tpu_custom_call.1} parent=1 // pred_fallthru
      _
    // Predicated region
    $region10: #{tpu_custom_call.1} parent=1 // pred_check
      _
    $region11: #{tpu_custom_call.1} parent=1 // pred_check_branch
      %38 = sbr.rel (0) target = $region13
    $region12: #{tpu_custom_call.1} parent=1 // pred_region
      %s40 = ssub.s32 8192, 8192
      %41 = vsyncadd [#allocation6], %s40
      %s42 = sshll.u32 [#allocation7], 4
      %s43 = int_to_ptr.vmem [resolvable:$true] %s42
      %48 = dma.hbm_to_vmem [thread:$0]  %s2, 8192, %s43, [#allocation6], 256, 256, 16
    $region13: #{tpu_custom_call.1} parent=1 // pred_fallthru
      _
    // Predicated region
    $region14: #{tpu_custom_call.1} parent=1 // pred_check
      _
    $region15: #{tpu_custom_call.1} parent=1 // pred_check_branch
      %50 = sbr.rel (0) target = $region17
    $region16: #{tpu_custom_call.1} parent=1 // pred_region
      %s52 = ssub.s32 8192, 8192
      %53 = vsyncadd [#allocation9], %s52
      %s54 = sshll.u32 [#allocation8], 4
      %s55 = int_to_ptr.vmem [resolvable:$true] %s54
      %60 = dma.hbm_to_vmem [thread:$0]  %s3, 8192, %s55, [#allocation9], 256, 256, 16
    $region17: #{tpu_custom_call.1} parent=1 // pred_fallthru
      _
    // Predicated region
    $region18: #{tpu_custom_call.1} parent=1 // pred_check
      _
    $region19: #{tpu_custom_call.1} parent=1 // pred_check_branch
      %62 = sbr.rel (0) target = $region21
    $region20: #{tpu_custom_call.1} parent=1 // pred_region
      %63 = dma.done [#allocation3], 768
    $region21: #{tpu_custom_call.1} parent=1 // pred_fallthru
      _
    // Predicated region
    $region22: #{tpu_custom_call.1} parent=1 // pred_check
      _
    $region23: #{tpu_custom_call.1} parent=1 // pred_check_branch
      %65 = sbr.rel (0) target = $region25
    $region24: #{tpu_custom_call.1} parent=1 // pred_region
      %66 = dma.done [#allocation6], 384
    $region25: #{tpu_custom_call.1} parent=1 // pred_fallthru
      _
    // Predicated region
    $region26: #{tpu_custom_call.1} parent=1 // pred_check
      _
    $region27: #{tpu_custom_call.1} parent=1 // pred_check_branch
      %68 = sbr.rel (0) target = $region29
    $region28: #{tpu_custom_call.1} parent=1 // pred_region
      %69 = dma.done [#allocation6], 8192
    $region29: #{tpu_custom_call.1} parent=1 // pred_fallthru
      _
    // Predicated region
    $region30: #{tpu_custom_call.1} parent=1 // pred_check
      _
    $region31: #{tpu_custom_call.1} parent=1 // pred_check_branch
      %71 = sbr.rel (0) target = $region33
    $region32: #{tpu_custom_call.1} parent=1 // pred_region
      %72 = dma.done [#allocation9], 8192
    $region33: #{tpu_custom_call.1} parent=1 // pred_fallthru
      _
    %v73 = vld [vmem:[#allocation2] sm:$0xff]
    %v74 = vld [vmem:[#allocation2 + $0x8] sm:$0xff]
    %v75 = vld [vmem:[#allocation2 + $0x10] sm:$0xff]
    %v76 = vld [vmem:[#allocation2 + $0x18] sm:$0xff]
    %v77 = vld [vmem:[#allocation2 + $0x20] sm:$0xff]
    %v78 = vld [vmem:[#allocation2 + $0x28] sm:$0xff]
    %v79 = vmul.f32 %v73, %v73
    %v80 = vmul.f32 %v74, %v74
    %v81 = vmul.f32 %v75, %v75
    %v82 = vmul.f32 %v76, %v76
    %v83 = vmul.f32 %v77, %v77
    %v84 = vmul.f32 %v78, %v78
    %v85 = vadd.f32 %v79, %v80
    %v86 = vadd.f32 %v85, %v81
    %v87 = vadd.f32 %v86, %v82
    %v88 = vadd.f32 %v87, %v83
    %v89 = vadd.f32 %v88, %v84
    %90 = vadd.xlane.f32.xlu0 %v89
    %v91 = vpop.xlane.xlu0 %90
    %v92 = vrot.slane %v91, 4
    %v93 = vadd.f32 %v91, %v92
    %v94 = vrot.slane %v93, 2
    %v95 = vadd.f32 %v93, %v94
    %v96 = vrot.slane %v95, 1
    %v97 = vadd.f32 %v95, %v96
    %s98 = vtos %v97
    %v99 = vpack.c.bf16 %v75, %v73
    %v100 = vpack.c.bf16 %v76, %v74
    %v101 = vpack.c.bf16 %v77, %v77
    %v102 = vpack.c.bf16 %v78, %v78
    %v103 = vld [vmem:[#allocation7] sm:$0xff]
    %v104 = vld [vmem:[#allocation7 + $0x8] sm:$0xff]
    %v105 = vld [vmem:[#allocation7 + $0x10] sm:$0xff]
    %v106 = vld [vmem:[#allocation7 + $0x18] sm:$0xff]
    %v107 = vld [vmem:[#allocation7 + $0x20] sm:$0xff]
    %v108 = vld [vmem:[#allocation7 + $0x28] sm:$0xff]
    %v109 = vld [vmem:[#allocation7 + $0x30] sm:$0xff]
    %v110 = vld [vmem:[#allocation7 + $0x38] sm:$0xff]
    %v111 = vld [vmem:[#allocation7 + $0x40] sm:$0xff]
    %v112 = vld [vmem:[#allocation7 + $0x48] sm:$0xff]
    %v113 = vld [vmem:[#allocation7 + $0x50] sm:$0xff]
    %v114 = vld [vmem:[#allocation7 + $0x58] sm:$0xff]
    %v115 = vld [vmem:[#allocation7 + $0x60] sm:$0xff]
    %v116 = vld [vmem:[#allocation7 + $0x68] sm:$0xff]
    %v117 = vld [vmem:[#allocation7 + $0x70] sm:$0xff]
    %v118 = vld [vmem:[#allocation7 + $0x78] sm:$0xff]
    %v119 = vld [vmem:[#allocation7 + $0x80] sm:$0xff]
    %v120 = vld [vmem:[#allocation7 + $0x88] sm:$0xff]
    %v121 = vld [vmem:[#allocation7 + $0x90] sm:$0xff]
    %v122 = vld [vmem:[#allocation7 + $0x98] sm:$0xff]
    %v123 = vld [vmem:[#allocation7 + $0xa0] sm:$0xff]
    %v124 = vld [vmem:[#allocation7 + $0xa8] sm:$0xff]
    %v125 = vld [vmem:[#allocation7 + $0xb0] sm:$0xff]
    %v126 = vld [vmem:[#allocation7 + $0xb8] sm:$0xff]
    %v127 = vld [vmem:[#allocation7 + $0xc0] sm:$0xff]
    %v128 = vld [vmem:[#allocation7 + $0xc8] sm:$0xff]
    %v129 = vld [vmem:[#allocation7 + $0xd0] sm:$0xff]
    %v130 = vld [vmem:[#allocation7 + $0xd8] sm:$0xff]
    %v131 = vld [vmem:[#allocation7 + $0xe0] sm:$0xff]
    %v132 = vld [vmem:[#allocation7 + $0xe8] sm:$0xff]
    %v133 = vld [vmem:[#allocation7 + $0xf0] sm:$0xff]
    %v134 = vld [vmem:[#allocation7 + $0xf8] sm:$0xff]
    %v135 = vld [vmem:[#allocation7 + $0x100] sm:$0xff]
    %v136 = vld [vmem:[#allocation7 + $0x108] sm:$0xff]
    %v137 = vld [vmem:[#allocation7 + $0x110] sm:$0xff]
    %v138 = vld [vmem:[#allocation7 + $0x118] sm:$0xff]
    %v139 = vld [vmem:[#allocation7 + $0x120] sm:$0xff]
    %v140 = vld [vmem:[#allocation7 + $0x128] sm:$0xff]
    %v141 = vld [vmem:[#allocation7 + $0x130] sm:$0xff]
    %v142 = vld [vmem:[#allocation7 + $0x138] sm:$0xff]
    %v143 = vld [vmem:[#allocation7 + $0x140] sm:$0xff]
    %v144 = vld [vmem:[#allocation7 + $0x148] sm:$0xff]
    %v145 = vld [vmem:[#allocation7 + $0x150] sm:$0xff]
    %v146 = vld [vmem:[#allocation7 + $0x158] sm:$0xff]
    %v147 = vld [vmem:[#allocation7 + $0x160] sm:$0xff]
    %v148 = vld [vmem:[#allocation7 + $0x168] sm:$0xff]
    %v149 = vld [vmem:[#allocation7 + $0x170] sm:$0xff]
    %v150 = vld [vmem:[#allocation7 + $0x178] sm:$0xff]
    %v151 = vld [vmem:[#allocation7 + $0x180] sm:$0xff]
    %v152 = vld [vmem:[#allocation7 + $0x188] sm:$0xff]
    %v153 = vld [vmem:[#allocation7 + $0x190] sm:$0xff]
    %v154 = vld [vmem:[#allocation7 + $0x198] sm:$0xff]
    %v155 = vld [vmem:[#allocation7 + $0x1a0] sm:$0xff]
    %v156 = vld [vmem:[#allocation7 + $0x1a8] sm:$0xff]
    %v157 = vld [vmem:[#allocation7 + $0x1b0] sm:$0xff]
    %v158 = vld [vmem:[#allocation7 + $0x1b8] sm:$0xff]
    %v159 = vld [vmem:[#allocation7 + $0x1c0] sm:$0xff]
    %v160 = vld [vmem:[#allocation7 + $0x1c8] sm:$0xff]
    %v161 = vld [vmem:[#allocation7 + $0x1d0] sm:$0xff]
    %v162 = vld [vmem:[#allocation7 + $0x1d8] sm:$0xff]
    %v163 = vld [vmem:[#allocation7 + $0x1e0] sm:$0xff]
    %v164 = vld [vmem:[#allocation7 + $0x1e8] sm:$0xff]
    %v165 = vld [vmem:[#allocation7 + $0x1f0] sm:$0xff]
    %v166 = vld [vmem:[#allocation7 + $0x1f8] sm:$0xff]
    %v167 = vld [vmem:[#allocation5] sm:$0xff]
    %v168 = vld [vmem:[#allocation5 + $0x8] sm:$0xff]
    %v169 = vld [vmem:[#allocation5 + $0x10] sm:$0xff]
    %v170 = vld [vmem:[#allocation8] sm:$0xff]
    %v171 = vld [vmem:[#allocation8 + $0x8] sm:$0xff]
    %v172 = vld [vmem:[#allocation8 + $0x10] sm:$0xff]
    %v173 = vld [vmem:[#allocation8 + $0x18] sm:$0xff]
    %v174 = vld [vmem:[#allocation8 + $0x20] sm:$0xff]
    %v175 = vld [vmem:[#allocation8 + $0x28] sm:$0xff]
    %v176 = vld [vmem:[#allocation8 + $0x30] sm:$0xff]
    %v177 = vld [vmem:[#allocation8 + $0x38] sm:$0xff]
    %v178 = vld [vmem:[#allocation8 + $0x40] sm:$0xff]
    %v179 = vld [vmem:[#allocation8 + $0x48] sm:$0xff]
    %v180 = vld [vmem:[#allocation8 + $0x50] sm:$0xff]
    %v181 = vld [vmem:[#allocation8 + $0x58] sm:$0xff]
    %v182 = vld [vmem:[#allocation8 + $0x60] sm:$0xff]
    %v183 = vld [vmem:[#allocation8 + $0x68] sm:$0xff]
    %v184 = vld [vmem:[#allocation8 + $0x70] sm:$0xff]
    %v185 = vld [vmem:[#allocation8 + $0x78] sm:$0xff]
    %v186 = vld [vmem:[#allocation8 + $0x80] sm:$0xff]
    %v187 = vld [vmem:[#allocation8 + $0x88] sm:$0xff]
    %v188 = vld [vmem:[#allocation8 + $0x90] sm:$0xff]
    %v189 = vld [vmem:[#allocation8 + $0x98] sm:$0xff]
    %v190 = vld [vmem:[#allocation8 + $0xa0] sm:$0xff]
    %v191 = vld [vmem:[#allocation8 + $0xa8] sm:$0xff]
    %v192 = vld [vmem:[#allocation8 + $0xb0] sm:$0xff]
    %v193 = vld [vmem:[#allocation8 + $0xb8] sm:$0xff]
    %v194 = vld [vmem:[#allocation8 + $0xc0] sm:$0xff]
    %v195 = vld [vmem:[#allocation8 + $0xc8] sm:$0xff]
    %v196 = vld [vmem:[#allocation8 + $0xd0] sm:$0xff]
    %v197 = vld [vmem:[#allocation8 + $0xd8] sm:$0xff]
    %v198 = vld [vmem:[#allocation8 + $0xe0] sm:$0xff]
    %v199 = vld [vmem:[#allocation8 + $0xe8] sm:$0xff]
    %v200 = vld [vmem:[#allocation8 + $0xf0] sm:$0xff]
    %v201 = vld [vmem:[#allocation8 + $0xf8] sm:$0xff]
    %v202 = vld [vmem:[#allocation8 + $0x100] sm:$0xff]
    %v203 = vld [vmem:[#allocation8 + $0x108] sm:$0xff]
    %v204 = vld [vmem:[#allocation8 + $0x110] sm:$0xff]
    %v205 = vld [vmem:[#allocation8 + $0x118] sm:$0xff]
    %v206 = vld [vmem:[#allocation8 + $0x120] sm:$0xff]
    %v207 = vld [vmem:[#allocation8 + $0x128] sm:$0xff]
    %v208 = vld [vmem:[#allocation8 + $0x130] sm:$0xff]
    %v209 = vld [vmem:[#allocation8 + $0x138] sm:$0xff]
    %v210 = vld [vmem:[#allocation8 + $0x140] sm:$0xff]
    %v211 = vld [vmem:[#allocation8 + $0x148] sm:$0xff]
    %v212 = vld [vmem:[#allocation8 + $0x150] sm:$0xff]
    %v213 = vld [vmem:[#allocation8 + $0x158] sm:$0xff]
    %v214 = vld [vmem:[#allocation8 + $0x160] sm:$0xff]
    %v215 = vld [vmem:[#allocation8 + $0x168] sm:$0xff]
    %v216 = vld [vmem:[#allocation8 + $0x170] sm:$0xff]
    %v217 = vld [vmem:[#allocation8 + $0x178] sm:$0xff]
    %v218 = vld [vmem:[#allocation8 + $0x180] sm:$0xff]
    %v219 = vld [vmem:[#allocation8 + $0x188] sm:$0xff]
    %v220 = vld [vmem:[#allocation8 + $0x190] sm:$0xff]
    %v221 = vld [vmem:[#allocation8 + $0x198] sm:$0xff]
    %v222 = vld [vmem:[#allocation8 + $0x1a0] sm:$0xff]
    %v223 = vld [vmem:[#allocation8 + $0x1a8] sm:$0xff]
    %v224 = vld [vmem:[#allocation8 + $0x1b0] sm:$0xff]
    %v225 = vld [vmem:[#allocation8 + $0x1b8] sm:$0xff]
    %v226 = vld [vmem:[#allocation8 + $0x1c0] sm:$0xff]
    %v227 = vld [vmem:[#allocation8 + $0x1c8] sm:$0xff]
    %v228 = vld [vmem:[#allocation8 + $0x1d0] sm:$0xff]
    %v229 = vld [vmem:[#allocation8 + $0x1d8] sm:$0xff]
    %v230 = vld [vmem:[#allocation8 + $0x1e0] sm:$0xff]
    %v231 = vld [vmem:[#allocation8 + $0x1e8] sm:$0xff]
    %v232 = vld [vmem:[#allocation8 + $0x1f0] sm:$0xff]
    %v233 = vld [vmem:[#allocation8 + $0x1f8] sm:$0xff]
    %v237 = vunpack.c.l.b16 %v167
    %v238 = vunpack.c.h.b16 %v167
    %v239 = vunpack.c.l.b16 %v168
    %v240 = vunpack.c.h.b16 %v168
    %v241 = vunpack.c.l.b16 %v169
    %v242 = vunpack.c.h.b16 %v169
    %v243 = vpack.c.b16 %v239, %v237
    %v244 = vpack.c.b16 %v240, %v238
    %v245 = vpack.c.b16 %v241, %v241
    %v246 = vpack.c.b16 %v242, %v242
    %v315 = vunpack.c.l.b16 %v170
    %v316 = vunpack.c.h.b16 %v170
    %v317 = vunpack.c.l.b16 %v171
    %v318 = vunpack.c.h.b16 %v171
    %v319 = vunpack.c.l.b16 %v172
    %v320 = vunpack.c.h.b16 %v172
    %v321 = vunpack.c.l.b16 %v173
    %v322 = vunpack.c.h.b16 %v173
    %v323 = vunpack.c.l.b16 %v174
    %v324 = vunpack.c.h.b16 %v174
    %v325 = vunpack.c.l.b16 %v175
    %v326 = vunpack.c.h.b16 %v175
    %v327 = vunpack.c.l.b16 %v176
    %v328 = vunpack.c.h.b16 %v176
    %v329 = vunpack.c.l.b16 %v177
    %v330 = vunpack.c.h.b16 %v177
    %v331 = vunpack.c.l.b16 %v178
    %v332 = vunpack.c.h.b16 %v178
    %v333 = vunpack.c.l.b16 %v179
    %v334 = vunpack.c.h.b16 %v179
    %v335 = vunpack.c.l.b16 %v180
    %v336 = vunpack.c.h.b16 %v180
    %v337 = vunpack.c.l.b16 %v181
    %v338 = vunpack.c.h.b16 %v181
    %v339 = vunpack.c.l.b16 %v182
    %v340 = vunpack.c.h.b16 %v182
    %v341 = vunpack.c.l.b16 %v183
    %v342 = vunpack.c.h.b16 %v183
    %v343 = vunpack.c.l.b16 %v184
    %v344 = vunpack.c.h.b16 %v184
    %v345 = vunpack.c.l.b16 %v185
    %v346 = vunpack.c.h.b16 %v185
    %v347 = vunpack.c.l.b16 %v186
    %v348 = vunpack.c.h.b16 %v186
    %v349 = vunpack.c.l.b16 %v187
    %v350 = vunpack.c.h.b16 %v187
    %v351 = vunpack.c.l.b16 %v188
    %v352 = vunpack.c.h.b16 %v188
    %v353 = vunpack.c.l.b16 %v189
    %v354 = vunpack.c.h.b16 %v189
    %v355 = vunpack.c.l.b16 %v190
    %v356 = vunpack.c.h.b16 %v190
    %v357 = vunpack.c.l.b16 %v191
    %v358 = vunpack.c.h.b16 %v191
    %v359 = vunpack.c.l.b16 %v192
    %v360 = vunpack.c.h.b16 %v192
    %v361 = vunpack.c.l.b16 %v193
    %v362 = vunpack.c.h.b16 %v193
    %v363 = vunpack.c.l.b16 %v194
    %v364 = vunpack.c.h.b16 %v194
    %v365 = vunpack.c.l.b16 %v195
    %v366 = vunpack.c.h.b16 %v195
    %v367 = vunpack.c.l.b16 %v196
    %v368 = vunpack.c.h.b16 %v196
    %v369 = vunpack.c.l.b16 %v197
    %v370 = vunpack.c.h.b16 %v197
    %v371 = vunpack.c.l.b16 %v198
    %v372 = vunpack.c.h.b16 %v198
    %v373 = vunpack.c.l.b16 %v199
    %v374 = vunpack.c.h.b16 %v199
    %v375 = vunpack.c.l.b16 %v200
    %v376 = vunpack.c.h.b16 %v200
    %v377 = vunpack.c.l.b16 %v201
    %v378 = vunpack.c.h.b16 %v201
    %v379 = vunpack.c.l.b16 %v202
    %v380 = vunpack.c.h.b16 %v202
    %v381 = vunpack.c.l.b16 %v203
    %v382 = vunpack.c.h.b16 %v203
    %v383 = vunpack.c.l.b16 %v204
    %v384 = vunpack.c.h.b16 %v204
    %v385 = vunpack.c.l.b16 %v205
    %v386 = vunpack.c.h.b16 %v205
    %v387 = vunpack.c.l.b16 %v206
    %v388 = vunpack.c.h.b16 %v206
    %v389 = vunpack.c.l.b16 %v207
    %v390 = vunpack.c.h.b16 %v207
    %v391 = vunpack.c.l.b16 %v208
    %v392 = vunpack.c.h.b16 %v208
    %v393 = vunpack.c.l.b16 %v209
    %v394 = vunpack.c.h.b16 %v209
    %v395 = vunpack.c.l.b16 %v210
    %v396 = vunpack.c.h.b16 %v210
    %v397 = vunpack.c.l.b16 %v211
    %v398 = vunpack.c.h.b16 %v211
    %v399 = vunpack.c.l.b16 %v212
    %v400 = vunpack.c.h.b16 %v212
    %v401 = vunpack.c.l.b16 %v213
    %v402 = vunpack.c.h.b16 %v213
    %v403 = vunpack.c.l.b16 %v214
    %v404 = vunpack.c.h.b16 %v214
    %v405 = vunpack.c.l.b16 %v215
    %v406 = vunpack.c.h.b16 %v215
    %v407 = vunpack.c.l.b16 %v216
    %v408 = vunpack.c.h.b16 %v216
    %v409 = vunpack.c.l.b16 %v217
    %v410 = vunpack.c.h.b16 %v217
    %v411 = vunpack.c.l.b16 %v218
    %v412 = vunpack.c.h.b16 %v218
    %v413 = vunpack.c.l.b16 %v219
    %v414 = vunpack.c.h.b16 %v219
    %v415 = vunpack.c.l.b16 %v220
    %v416 = vunpack.c.h.b16 %v220
    %v417 = vunpack.c.l.b16 %v221
    %v418 = vunpack.c.h.b16 %v221
    %v419 = vunpack.c.l.b16 %v222
    %v420 = vunpack.c.h.b16 %v222
    %v421 = vunpack.c.l.b16 %v223
    %v422 = vunpack.c.h.b16 %v223
    %v423 = vunpack.c.l.b16 %v224
    %v424 = vunpack.c.h.b16 %v224
    %v425 = vunpack.c.l.b16 %v225
    %v426 = vunpack.c.h.b16 %v225
    %v427 = vunpack.c.l.b16 %v226
    %v428 = vunpack.c.h.b16 %v226
    %v429 = vunpack.c.l.b16 %v227
    %v430 = vunpack.c.h.b16 %v227
    %v431 = vunpack.c.l.b16 %v228
    %v432 = vunpack.c.h.b16 %v228
    %v433 = vunpack.c.l.b16 %v229
    %v434 = vunpack.c.h.b16 %v229
    %v435 = vunpack.c.l.b16 %v230
    %v436 = vunpack.c.h.b16 %v230
    %v437 = vunpack.c.l.b16 %v231
    %v438 = vunpack.c.h.b16 %v231
    %v439 = vunpack.c.l.b16 %v232
    %v440 = vunpack.c.h.b16 %v232
    %v441 = vunpack.c.l.b16 %v233
    %v442 = vunpack.c.h.b16 %v233
    %v443 = vpack.c.b16 %v319, %v315
    %v444 = vpack.c.b16 %v320, %v316
    %v445 = vpack.c.b16 %v321, %v317
    %v446 = vpack.c.b16 %v322, %v318
    %v447 = vpack.c.b16 %v327, %v323
    %v448 = vpack.c.b16 %v328, %v324
    %v449 = vpack.c.b16 %v329, %v325
    %v450 = vpack.c.b16 %v330, %v326
    %v451 = vpack.c.b16 %v335, %v331
    %v452 = vpack.c.b16 %v336, %v332
    %v453 = vpack.c.b16 %v337, %v333
    %v454 = vpack.c.b16 %v338, %v334
    %v455 = vpack.c.b16 %v343, %v339
    %v456 = vpack.c.b16 %v344, %v340
    %v457 = vpack.c.b16 %v345, %v341
    %v458 = vpack.c.b16 %v346, %v342
    %v459 = vpack.c.b16 %v351, %v347
    %v460 = vpack.c.b16 %v352, %v348
    %v461 = vpack.c.b16 %v353, %v349
    %v462 = vpack.c.b16 %v354, %v350
    %v463 = vpack.c.b16 %v359, %v355
    %v464 = vpack.c.b16 %v360, %v356
    %v465 = vpack.c.b16 %v361, %v357
    %v466 = vpack.c.b16 %v362, %v358
    %v467 = vpack.c.b16 %v367, %v363
    %v468 = vpack.c.b16 %v368, %v364
    %v469 = vpack.c.b16 %v369, %v365
    %v470 = vpack.c.b16 %v370, %v366
    %v471 = vpack.c.b16 %v375, %v371
    %v472 = vpack.c.b16 %v376, %v372
    %v473 = vpack.c.b16 %v377, %v373
    %v474 = vpack.c.b16 %v378, %v374
    %v475 = vpack.c.b16 %v383, %v379
    %v476 = vpack.c.b16 %v384, %v380
    %v477 = vpack.c.b16 %v385, %v381
    %v478 = vpack.c.b16 %v386, %v382
    %v479 = vpack.c.b16 %v391, %v387
    %v480 = vpack.c.b16 %v392, %v388
    %v481 = vpack.c.b16 %v393, %v389
    %v482 = vpack.c.b16 %v394, %v390
    %v483 = vpack.c.b16 %v399, %v395
    %v484 = vpack.c.b16 %v400, %v396
    %v485 = vpack.c.b16 %v401, %v397
    %v486 = vpack.c.b16 %v402, %v398
    %v487 = vpack.c.b16 %v407, %v403
    %v488 = vpack.c.b16 %v408, %v404
    %v489 = vpack.c.b16 %v409, %v405
    %v490 = vpack.c.b16 %v410, %v406
    %v491 = vpack.c.b16 %v415, %v411
    %v492 = vpack.c.b16 %v416, %v412
    %v493 = vpack.c.b16 %v417, %v413
    %v494 = vpack.c.b16 %v418, %v414
    %v495 = vpack.c.b16 %v423, %v419
    %v496 = vpack.c.b16 %v424, %v420
    %v497 = vpack.c.b16 %v425, %v421
    %v498 = vpack.c.b16 %v426, %v422
    %v499 = vpack.c.b16 %v431, %v427
    %v500 = vpack.c.b16 %v432, %v428
    %v501 = vpack.c.b16 %v433, %v429
    %v502 = vpack.c.b16 %v434, %v430
    %v503 = vpack.c.b16 %v439, %v435
    %v504 = vpack.c.b16 %v440, %v436
    %v505 = vpack.c.b16 %v441, %v437
    %v506 = vpack.c.b16 %v442, %v438
    %571 = vmatprep.subr.bf16.mxu0 %v444
    %572 = vmatpush1.bf16.msra.mxu0 %v443
    %573 = vmatprep.subr.bf16.mxu0 %v448
    %574 = vmatpush1.bf16.msra.mxu0 %v447
    %575 = vmatprep.subr.bf16.mxu0 %v452
    %576 = vmatpush1.bf16.msra.mxu0 %v451
    %577 = vmatprep.subr.bf16.mxu0 %v456
    %578 = vmatpush1.bf16.msra.mxu0 %v455
    %579 = vmatprep.subr.bf16.mxu0 %v460
    %580 = vmatpush1.bf16.msra.mxu0 %v459
    %581 = vmatprep.subr.bf16.mxu0 %v464
    %582 = vmatpush1.bf16.msra.mxu0 %v463
    %583 = vmatprep.subr.bf16.mxu0 %v468
    %584 = vmatpush1.bf16.msra.mxu0 %v467
    %585 = vmatprep.subr.bf16.mxu0 %v472
    %586 = vmatpush1.bf16.msra.mxu0 %v471
    %587 = vmatprep.subr.bf16.mxu0 %v476
    %588 = vmatpush1.bf16.msra.mxu0 %v475
    %589 = vmatprep.subr.bf16.mxu0 %v480
    %590 = vmatpush1.bf16.msra.mxu0 %v479
    %591 = vmatprep.subr.bf16.mxu0 %v484
    %592 = vmatpush1.bf16.msra.mxu0 %v483
    %593 = vmatprep.subr.bf16.mxu0 %v488
    %594 = vmatpush1.bf16.msra.mxu0 %v487
    %595 = vmatprep.subr.bf16.mxu0 %v492
    %596 = vmatpush1.bf16.msra.mxu0 %v491
    %597 = vmatprep.subr.bf16.mxu0 %v496
    %598 = vmatpush1.bf16.msra.mxu0 %v495
    %599 = vmatprep.subr.bf16.mxu0 %v500
    %600 = vmatpush1.bf16.msra.mxu0 %v499
    %601 = vmatprep.subr.bf16.mxu0 %v504
    %602 = vmatpush1.bf16.msra.mxu0 %v503
    %603 = vmatprep.mubr.bf16.mxu0 %v244
    %604 = vmatmul.mubr.bf16.gmra.mrb[0].mxu0 %v243
    %v605 = vpop.f32.mrb[0].mxu0
    %v606 = vadd.f32 0.0, %v605
    %v607 = vpop.f32.mrb[0].mxu0
    %v608 = vadd.f32 0.0, %v607
    %v609 = vpop.f32.mrb[0].mxu0
    %v610 = vadd.f32 0.0, %v609
    %v611 = vpop.f32.mrb[0].mxu0
    %v612 = vadd.f32 0.0, %v611
    %613 = vmatprep.mubr.bf16.mxu0 %v246
    %614 = vmatmul.mubr.bf16.gmra.mrb[0].mxu0 %v245
    %v615 = vpop.f32.mrb[0].mxu0
    %v616 = vadd.f32 0.0, %v615
    %v617 = vpop.f32.mrb[0].mxu0
    %v618 = vadd.f32 0.0, %v617
    %v619 = vpop.f32.mrb[0].mxu0
    %v620 = vpop.f32.mrb[0].mxu0
    %621 = vdwg.mxu0
    %622 = vmatprep.subr.bf16.mxu0 %v446
    %623 = vmatpush1.bf16.msra.mxu0 %v445
    %624 = vmatprep.subr.bf16.mxu0 %v450
    %625 = vmatpush1.bf16.msra.mxu0 %v449
    %626 = vmatprep.subr.bf16.mxu0 %v454
    %627 = vmatpush1.bf16.msra.mxu0 %v453
    %628 = vmatprep.subr.bf16.mxu0 %v458
    %629 = vmatpush1.bf16.msra.mxu0 %v457
    %630 = vmatprep.subr.bf16.mxu0 %v462
    %631 = vmatpush1.bf16.msra.mxu0 %v461
    %632 = vmatprep.subr.bf16.mxu0 %v466
    %633 = vmatpush1.bf16.msra.mxu0 %v465
    %634 = vmatprep.subr.bf16.mxu0 %v470
    %635 = vmatpush1.bf16.msra.mxu0 %v469
    %636 = vmatprep.subr.bf16.mxu0 %v474
    %637 = vmatpush1.bf16.msra.mxu0 %v473
    %638 = vmatprep.subr.bf16.mxu0 %v478
    %639 = vmatpush1.bf16.msra.mxu0 %v477
    %640 = vmatprep.subr.bf16.mxu0 %v482
    %641 = vmatpush1.bf16.msra.mxu0 %v481
    %642 = vmatprep.subr.bf16.mxu0 %v486
    %643 = vmatpush1.bf16.msra.mxu0 %v485
    %644 = vmatprep.subr.bf16.mxu0 %v490
    %645 = vmatpush1.bf16.msra.mxu0 %v489
    %646 = vmatprep.subr.bf16.mxu0 %v494
    %647 = vmatpush1.bf16.msra.mxu0 %v493
    %648 = vmatprep.subr.bf16.mxu0 %v498
    %649 = vmatpush1.bf16.msra.mxu0 %v497
    %650 = vmatprep.subr.bf16.mxu0 %v502
    %651 = vmatpush1.bf16.msra.mxu0 %v501
    %652 = vmatprep.subr.bf16.mxu0 %v506
    %653 = vmatpush1.bf16.msra.mxu0 %v505
    %654 = vmatprep.mubr.bf16.mxu0 %v244
    %655 = vmatmul.mubr.bf16.gmra.mrb[0].mxu0 %v243
    %v656 = vpop.f32.mrb[0].mxu0
    %v657 = vadd.f32 0.0, %v656
    %v658 = vpop.f32.mrb[0].mxu0
    %v659 = vadd.f32 0.0, %v658
    %v660 = vpop.f32.mrb[0].mxu0
    %v661 = vadd.f32 0.0, %v660
    %v662 = vpop.f32.mrb[0].mxu0
    %v663 = vadd.f32 0.0, %v662
    %664 = vmatprep.mubr.bf16.mxu0 %v246
    %665 = vmatmul.mubr.bf16.gmra.mrb[0].mxu0 %v245
    %v666 = vpop.f32.mrb[0].mxu0
    %v667 = vadd.f32 0.0, %v666
    %v668 = vpop.f32.mrb[0].mxu0
    %v669 = vadd.f32 0.0, %v668
    %v670 = vpop.f32.mrb[0].mxu0
    %v671 = vpop.f32.mrb[0].mxu0
    %672 = vdwg.mxu0
    %v737 = vunpack.c.l.b16 %v103
    %v738 = vunpack.c.h.b16 %v103
    %v739 = vunpack.c.l.b16 %v104
    %v740 = vunpack.c.h.b16 %v104
    %v741 = vunpack.c.l.b16 %v105
    %v742 = vunpack.c.h.b16 %v105
    %v743 = vunpack.c.l.b16 %v106
    %v744 = vunpack.c.h.b16 %v106
    %v745 = vunpack.c.l.b16 %v107
    %v746 = vunpack.c.h.b16 %v107
    %v747 = vunpack.c.l.b16 %v108
    %v748 = vunpack.c.h.b16 %v108
    %v749 = vunpack.c.l.b16 %v109
    %v750 = vunpack.c.h.b16 %v109
    %v751 = vunpack.c.l.b16 %v110
    %v752 = vunpack.c.h.b16 %v110
    %v753 = vunpack.c.l.b16 %v111
    %v754 = vunpack.c.h.b16 %v111
    %v755 = vunpack.c.l.b16 %v112
    %v756 = vunpack.c.h.b16 %v112
    %v757 = vunpack.c.l.b16 %v113
    %v758 = vunpack.c.h.b16 %v113
    %v759 = vunpack.c.l.b16 %v114
    %v760 = vunpack.c.h.b16 %v114
    %v761 = vunpack.c.l.b16 %v115
    %v762 = vunpack.c.h.b16 %v115
    %v763 = vunpack.c.l.b16 %v116
    %v764 = vunpack.c.h.b16 %v116
    %v765 = vunpack.c.l.b16 %v117
    %v766 = vunpack.c.h.b16 %v117
    %v767 = vunpack.c.l.b16 %v118
    %v768 = vunpack.c.h.b16 %v118
    %v769 = vunpack.c.l.b16 %v119
    %v770 = vunpack.c.h.b16 %v119
    %v771 = vunpack.c.l.b16 %v120
    %v772 = vunpack.c.h.b16 %v120
    %v773 = vunpack.c.l.b16 %v121
    %v774 = vunpack.c.h.b16 %v121
    %v775 = vunpack.c.l.b16 %v122
    %v776 = vunpack.c.h.b16 %v122
    %v777 = vunpack.c.l.b16 %v123
    %v778 = vunpack.c.h.b16 %v123
    %v779 = vunpack.c.l.b16 %v124
    %v780 = vunpack.c.h.b16 %v124
    %v781 = vunpack.c.l.b16 %v125
    %v782 = vunpack.c.h.b16 %v125
    %v783 = vunpack.c.l.b16 %v126
    %v784 = vunpack.c.h.b16 %v126
    %v785 = vunpack.c.l.b16 %v127
    %v786 = vunpack.c.h.b16 %v127
    %v787 = vunpack.c.l.b16 %v128
    %v788 = vunpack.c.h.b16 %v128
    %v789 = vunpack.c.l.b16 %v129
    %v790 = vunpack.c.h.b16 %v129
    %v791 = vunpack.c.l.b16 %v130
    %v792 = vunpack.c.h.b16 %v130
    %v793 = vunpack.c.l.b16 %v131
    %v794 = vunpack.c.h.b16 %v131
    %v795 = vunpack.c.l.b16 %v132
    %v796 = vunpack.c.h.b16 %v132
    %v797 = vunpack.c.l.b16 %v133
    %v798 = vunpack.c.h.b16 %v133
    %v799 = vunpack.c.l.b16 %v134
    %v800 = vunpack.c.h.b16 %v134
    %v801 = vunpack.c.l.b16 %v135
    %v802 = vunpack.c.h.b16 %v135
    %v803 = vunpack.c.l.b16 %v136
    %v804 = vunpack.c.h.b16 %v136
    %v805 = vunpack.c.l.b16 %v137
    %v806 = vunpack.c.h.b16 %v137
    %v807 = vunpack.c.l.b16 %v138
    %v808 = vunpack.c.h.b16 %v138
    %v809 = vunpack.c.l.b16 %v139
    %v810 = vunpack.c.h.b16 %v139
    %v811 = vunpack.c.l.b16 %v140
    %v812 = vunpack.c.h.b16 %v140
    %v813 = vunpack.c.l.b16 %v141
    %v814 = vunpack.c.h.b16 %v141
    %v815 = vunpack.c.l.b16 %v142
    %v816 = vunpack.c.h.b16 %v142
    %v817 = vunpack.c.l.b16 %v143
    %v818 = vunpack.c.h.b16 %v143
    %v819 = vunpack.c.l.b16 %v144
    %v820 = vunpack.c.h.b16 %v144
    %v821 = vunpack.c.l.b16 %v145
    %v822 = vunpack.c.h.b16 %v145
    %v823 = vunpack.c.l.b16 %v146
    %v824 = vunpack.c.h.b16 %v146
    %v825 = vunpack.c.l.b16 %v147
    %v826 = vunpack.c.h.b16 %v147
    %v827 = vunpack.c.l.b16 %v148
    %v828 = vunpack.c.h.b16 %v148
    %v829 = vunpack.c.l.b16 %v149
    %v830 = vunpack.c.h.b16 %v149
    %v831 = vunpack.c.l.b16 %v150
    %v832 = vunpack.c.h.b16 %v150
    %v833 = vunpack.c.l.b16 %v151
    %v834 = vunpack.c.h.b16 %v151
    %v835 = vunpack.c.l.b16 %v152
    %v836 = vunpack.c.h.b16 %v152
    %v837 = vunpack.c.l.b16 %v153
    %v838 = vunpack.c.h.b16 %v153
    %v839 = vunpack.c.l.b16 %v154
    %v840 = vunpack.c.h.b16 %v154
    %v841 = vunpack.c.l.b16 %v155
    %v842 = vunpack.c.h.b16 %v155
    %v843 = vunpack.c.l.b16 %v156
    %v844 = vunpack.c.h.b16 %v156
    %v845 = vunpack.c.l.b16 %v157
    %v846 = vunpack.c.h.b16 %v157
    %v847 = vunpack.c.l.b16 %v158
    %v848 = vunpack.c.h.b16 %v158
    %v849 = vunpack.c.l.b16 %v159
    %v850 = vunpack.c.h.b16 %v159
    %v851 = vunpack.c.l.b16 %v160
    %v852 = vunpack.c.h.b16 %v160
    %v853 = vunpack.c.l.b16 %v161
    %v854 = vunpack.c.h.b16 %v161
    %v855 = vunpack.c.l.b16 %v162
    %v856 = vunpack.c.h.b16 %v162
    %v857 = vunpack.c.l.b16 %v163
    %v858 = vunpack.c.h.b16 %v163
    %v859 = vunpack.c.l.b16 %v164
    %v860 = vunpack.c.h.b16 %v164
    %v861 = vunpack.c.l.b16 %v165
    %v862 = vunpack.c.h.b16 %v165
    %v863 = vunpack.c.l.b16 %v166
    %v864 = vunpack.c.h.b16 %v166
    %v865 = vpack.c.b16 %v741, %v737
    %v866 = vpack.c.b16 %v742, %v738
    %v867 = vpack.c.b16 %v743, %v739
    %v868 = vpack.c.b16 %v744, %v740
    %v869 = vpack.c.b16 %v749, %v745
    %v870 = vpack.c.b16 %v750, %v746
    %v871 = vpack.c.b16 %v751, %v747
    %v872 = vpack.c.b16 %v752, %v748
    %v873 = vpack.c.b16 %v757, %v753
    %v874 = vpack.c.b16 %v758, %v754
    %v875 = vpack.c.b16 %v759, %v755
    %v876 = vpack.c.b16 %v760, %v756
    %v877 = vpack.c.b16 %v765, %v761
    %v878 = vpack.c.b16 %v766, %v762
    %v879 = vpack.c.b16 %v767, %v763
    %v880 = vpack.c.b16 %v768, %v764
    %v881 = vpack.c.b16 %v773, %v769
    %v882 = vpack.c.b16 %v774, %v770
    %v883 = vpack.c.b16 %v775, %v771
    %v884 = vpack.c.b16 %v776, %v772
    %v885 = vpack.c.b16 %v781, %v777
    %v886 = vpack.c.b16 %v782, %v778
    %v887 = vpack.c.b16 %v783, %v779
    %v888 = vpack.c.b16 %v784, %v780
    %v889 = vpack.c.b16 %v789, %v785
    %v890 = vpack.c.b16 %v790, %v786
    %v891 = vpack.c.b16 %v791, %v787
    %v892 = vpack.c.b16 %v792, %v788
    %v893 = vpack.c.b16 %v797, %v793
    %v894 = vpack.c.b16 %v798, %v794
    %v895 = vpack.c.b16 %v799, %v795
    %v896 = vpack.c.b16 %v800, %v796
    %v897 = vpack.c.b16 %v805, %v801
    %v898 = vpack.c.b16 %v806, %v802
    %v899 = vpack.c.b16 %v807, %v803
    %v900 = vpack.c.b16 %v808, %v804
    %v901 = vpack.c.b16 %v813, %v809
    %v902 = vpack.c.b16 %v814, %v810
    %v903 = vpack.c.b16 %v815, %v811
    %v904 = vpack.c.b16 %v816, %v812
    %v905 = vpack.c.b16 %v821, %v817
    %v906 = vpack.c.b16 %v822, %v818
    %v907 = vpack.c.b16 %v823, %v819
    %v908 = vpack.c.b16 %v824, %v820
    %v909 = vpack.c.b16 %v829, %v825
    %v910 = vpack.c.b16 %v830, %v826
    %v911 = vpack.c.b16 %v831, %v827
    %v912 = vpack.c.b16 %v832, %v828
    %v913 = vpack.c.b16 %v837, %v833
    %v914 = vpack.c.b16 %v838, %v834
    %v915 = vpack.c.b16 %v839, %v835
    %v916 = vpack.c.b16 %v840, %v836
    %v917 = vpack.c.b16 %v845, %v841
    %v918 = vpack.c.b16 %v846, %v842
    %v919 = vpack.c.b16 %v847, %v843
    %v920 = vpack.c.b16 %v848, %v844
    %v921 = vpack.c.b16 %v853, %v849
    %v922 = vpack.c.b16 %v854, %v850
    %v923 = vpack.c.b16 %v855, %v851
    %v924 = vpack.c.b16 %v856, %v852
    %v925 = vpack.c.b16 %v861, %v857
    %v926 = vpack.c.b16 %v862, %v858
    %v927 = vpack.c.b16 %v863, %v859
    %v928 = vpack.c.b16 %v864, %v860
    %993 = vmatprep.subr.bf16.mxu0 %v866
    %994 = vmatpush1.bf16.msra.mxu0 %v865
    %995 = vmatprep.subr.bf16.mxu0 %v870
    %996 = vmatpush1.bf16.msra.mxu0 %v869
    %997 = vmatprep.subr.bf16.mxu0 %v874
    %998 = vmatpush1.bf16.msra.mxu0 %v873
    %999 = vmatprep.subr.bf16.mxu0 %v878
    %1000 = vmatpush1.bf16.msra.mxu0 %v877
    %1001 = vmatprep.subr.bf16.mxu0 %v882
    %1002 = vmatpush1.bf16.msra.mxu0 %v881
    %1003 = vmatprep.subr.bf16.mxu0 %v886
    %1004 = vmatpush1.bf16.msra.mxu0 %v885
    %1005 = vmatprep.subr.bf16.mxu0 %v890
    %1006 = vmatpush1.bf16.msra.mxu0 %v889
    %1007 = vmatprep.subr.bf16.mxu0 %v894
    %1008 = vmatpush1.bf16.msra.mxu0 %v893
    %1009 = vmatprep.subr.bf16.mxu0 %v898
    %1010 = vmatpush1.bf16.msra.mxu0 %v897
    %1011 = vmatprep.subr.bf16.mxu0 %v902
    %1012 = vmatpush1.bf16.msra.mxu0 %v901
    %1013 = vmatprep.subr.bf16.mxu0 %v906
    %1014 = vmatpush1.bf16.msra.mxu0 %v905
    %1015 = vmatprep.subr.bf16.mxu0 %v910
    %1016 = vmatpush1.bf16.msra.mxu0 %v909
    %1017 = vmatprep.subr.bf16.mxu0 %v914
    %1018 = vmatpush1.bf16.msra.mxu0 %v913
    %1019 = vmatprep.subr.bf16.mxu0 %v918
    %1020 = vmatpush1.bf16.msra.mxu0 %v917
    %1021 = vmatprep.subr.bf16.mxu0 %v922
    %1022 = vmatpush1.bf16.msra.mxu0 %v921
    %1023 = vmatprep.subr.bf16.mxu0 %v926
    %1024 = vmatpush1.bf16.msra.mxu0 %v925
    %1025 = vmatprep.mubr.bf16.mxu0 %v100
    %1026 = vmatmul.mubr.bf16.gmra.mrb[0].mxu0 %v99
    %v1027 = vpop.f32.mrb[0].mxu0
    %v1028 = vadd.f32 %v606, %v1027
    %v1029 = vpop.f32.mrb[0].mxu0
    %v1030 = vadd.f32 %v608, %v1029
    %v1031 = vpop.f32.mrb[0].mxu0
    %v1032 = vadd.f32 %v610, %v1031
    %v1033 = vpop.f32.mrb[0].mxu0
    %v1034 = vadd.f32 %v612, %v1033
    %1035 = vmatprep.mubr.bf16.mxu0 %v102
    %1036 = vmatmul.mubr.bf16.gmra.mrb[0].mxu0 %v101
    %v1037 = vpop.f32.mrb[0].mxu0
    %v1038 = vadd.f32 %v616, %v1037
    %v1039 = vpop.f32.mrb[0].mxu0
    %v1040 = vadd.f32 %v618, %v1039
    %v1041 = vpop.f32.mrb[0].mxu0
    %v1042 = vpop.f32.mrb[0].mxu0
    %1043 = vdwg.mxu0
    %1044 = vmatprep.subr.bf16.mxu0 %v868
    %1045 = vmatpush1.bf16.msra.mxu0 %v867
    %1046 = vmatprep.subr.bf16.mxu0 %v872
    %1047 = vmatpush1.bf16.msra.mxu0 %v871
    %1048 = vmatprep.subr.bf16.mxu0 %v876
    %1049 = vmatpush1.bf16.msra.mxu0 %v875
    %1050 = vmatprep.subr.bf16.mxu0 %v880
    %1051 = vmatpush1.bf16.msra.mxu0 %v879
    %1052 = vmatprep.subr.bf16.mxu0 %v884
    %1053 = vmatpush1.bf16.msra.mxu0 %v883
    %1054 = vmatprep.subr.bf16.mxu0 %v888
    %1055 = vmatpush1.bf16.msra.mxu0 %v887
    %1056 = vmatprep.subr.bf16.mxu0 %v892
    %1057 = vmatpush1.bf16.msra.mxu0 %v891
    %1058 = vmatprep.subr.bf16.mxu0 %v896
    %1059 = vmatpush1.bf16.msra.mxu0 %v895
    %1060 = vmatprep.subr.bf16.mxu0 %v900
    %1061 = vmatpush1.bf16.msra.mxu0 %v899
    %1062 = vmatprep.subr.bf16.mxu0 %v904
    %1063 = vmatpush1.bf16.msra.mxu0 %v903
    %1064 = vmatprep.subr.bf16.mxu0 %v908
    %1065 = vmatpush1.bf16.msra.mxu0 %v907
    %1066 = vmatprep.subr.bf16.mxu0 %v912
    %1067 = vmatpush1.bf16.msra.mxu0 %v911
    %1068 = vmatprep.subr.bf16.mxu0 %v916
    %1069 = vmatpush1.bf16.msra.mxu0 %v915
    %1070 = vmatprep.subr.bf16.mxu0 %v920
    %1071 = vmatpush1.bf16.msra.mxu0 %v919
    %1072 = vmatprep.subr.bf16.mxu0 %v924
    %1073 = vmatpush1.bf16.msra.mxu0 %v923
    %1074 = vmatprep.subr.bf16.mxu0 %v928
    %1075 = vmatpush1.bf16.msra.mxu0 %v927
    %1076 = vmatprep.mubr.bf16.mxu0 %v100
    %1077 = vmatmul.mubr.bf16.gmra.mrb[0].mxu0 %v99
    %v1078 = vpop.f32.mrb[0].mxu0
    %v1079 = vadd.f32 %v657, %v1078
    %v1080 = vpop.f32.mrb[0].mxu0
    %v1081 = vadd.f32 %v659, %v1080
    %v1082 = vpop.f32.mrb[0].mxu0
    %v1083 = vadd.f32 %v661, %v1082
    %v1084 = vpop.f32.mrb[0].mxu0
    %v1085 = vadd.f32 %v663, %v1084
    %1086 = vmatprep.mubr.bf16.mxu0 %v102
    %1087 = vmatmul.mubr.bf16.gmra.mrb[0].mxu0 %v101
    %v1088 = vpop.f32.mrb[0].mxu0
    %v1089 = vadd.f32 %v667, %v1088
    %v1090 = vpop.f32.mrb[0].mxu0
    %v1091 = vadd.f32 %v669, %v1090
    %v1092 = vpop.f32.mrb[0].mxu0
    %v1093 = vpop.f32.mrb[0].mxu0
    %1094 = vdwg.mxu0
    %v1095 = vand.u32 2147483647, %v1028
    %v1096 = vand.u32 2147483647, %v1030
    %v1097 = vand.u32 2147483647, %v1079
    %v1098 = vand.u32 2147483647, %v1081
    %v1099 = vand.u32 2147483647, %v1032
    %v1100 = vand.u32 2147483647, %v1034
    %v1101 = vand.u32 2147483647, %v1083
    %v1102 = vand.u32 2147483647, %v1085
    %v1103 = vand.u32 2147483647, %v1038
    %v1104 = vand.u32 2147483647, %v1040
    %v1105 = vand.u32 2147483647, %v1089
    %v1106 = vand.u32 2147483647, %v1091
    %v1107 = vadd.f32 %v1095, %v1096
    %v1108 = vadd.f32 %v1107, %v1097
    %v1109 = vadd.f32 %v1108, %v1098
    %v1110 = vadd.f32 %v1109, %v1099
    %v1111 = vadd.f32 %v1110, %v1100
    %v1112 = vadd.f32 %v1111, %v1101
    %v1113 = vadd.f32 %v1112, %v1102
    %v1114 = vadd.f32 %v1113, %v1103
    %v1115 = vadd.f32 %v1114, %v1104
    %v1116 = vadd.f32 %v1115, %v1105
    %v1117 = vadd.f32 %v1116, %v1106
    %1118 = vadd.xlane.f32.xlu0 %v1117
    %v1119 = vpop.xlane.xlu0 %1118
    %v1120 = vrot.slane %v1119, 4
    %v1121 = vadd.f32 %v1119, %v1120
    %v1122 = vrot.slane %v1121, 2
    %v1123 = vadd.f32 %v1121, %v1122
    %v1124 = vrot.slane %v1123, 1
    %v1125 = vadd.f32 %v1123, %v1124
    %s1126 = vtos %v1125
    %s1127 = smul.f32 %s98, 0.00012207031
    %s1128 = smul.f32 %s1126, 0.00021616947
    %s1129 = sadd.f32 %s1127, %s1128
    %v1130 = vstv %s1129
    %1131 = vst [vmem:[#allocation10] sm:$0x1] %v1130
    // Predicated region
    $region34: #{tpu_custom_call.1} parent=1 // pred_check
      _
    $region35: #{tpu_custom_call.1} parent=1 // pred_check_branch
      %1133 = sbr.rel (0) target = $region37
    $region36: #{tpu_custom_call.1} parent=1 // pred_region
      %s1135 = ssub.s32 16, 16
      %1136 = vsyncadd [#allocation4], %s1135
      %s1138 = sshll.u32 [#allocation10], 4
      %s1139 = int_to_ptr.vmem [resolvable:$true] %s1138
      %1141 = dma.vmem_to_hbm [thread:$0]  %s1139, 16, %s4, [#allocation4]
    $region37: #{tpu_custom_call.1} parent=1 // pred_fallthru
      _
    // Predicated region
    $region38: #{tpu_custom_call.1} parent=1 // pred_check
      _
    $region39: #{tpu_custom_call.1} parent=1 // pred_check_branch
      %1143 = sbr.rel (0) target = $region41
    $region40: #{tpu_custom_call.1} parent=1 // pred_region
      %1144 = dma.done [#allocation4], 16
    $region41: #{tpu_custom_call.1} parent=1 // pred_fallthru
      _
    %1145 = vsyncpa [#allocation3], 1
    %1146 = vsyncpa [#allocation6], 1
    %1147 = vsyncpa [#allocation9], 1
    %1148 = vsyncpa [#allocation4], 1

</llo_original>
